<compile_context>
chip_gen: v7x
topology: tpu7x:2x2x1
jax: 0.10.0
libtpu: 0.0.40
codegen_flags: <defaults>
</compile_context>

<pallas_src>
import functools

import jax
import jax.numpy as jnp
from jax import lax
from jax.experimental import pallas as pl
from jax.experimental.pallas import tpu as pltpu


# ----------------------------- kernel --------------------------------------

def _matmul_bias_kernel(patch_ref, w_ref, bias_ref, o_ref):
    # patch_ref: (KP, TM)  bf16  transposed im2col columns for this (image, tile)
    # w_ref:     (OC, KP)  bf16  BN-scale-folded, K-zero-padded weights
    # bias_ref:  (OC, 1)   f32   folded BN bias
    # o_ref:     (OC, TM)  f32   lane-dense output tile (NCHW element order)
    acc = jnp.dot(w_ref[...], patch_ref[...],
                  preferred_element_type=jnp.float32)        # (OC, TM) f32, MXU
    o_ref[...] = (acc + bias_ref[...]).astype(o_ref.dtype)   # per-OC BN bias


# ----------------------------- helpers --------------------------------------

def _round_up(x, m):
    return (x + m - 1) // m * m


def _vmem_block_bytes(block_shape, dtype):
    """VMEM footprint of a block with trailing dims rounded to (sublane, 128)."""
    itemsize = jnp.dtype(dtype).itemsize
    sublane = max(8, 32 // itemsize)          # f32: 8, bf16: 16, int8: 32
    dims = list(block_shape)
    if len(dims) == 1:
        dims = [1] + dims
    lead = 1
    for d in dims[:-2]:
        lead *= int(d)
    return lead * _round_up(int(dims[-2]), sublane) * _round_up(int(dims[-1]), 128) * itemsize


def _pick_spatial_tile(M, cap=2048):
    """Largest 128-multiple divisor of M that is <= cap; else the whole axis."""
    if M <= cap or M % 128 != 0:
        return M
    tm = 128
    for t in range(256, cap + 1, 128):
        if M % t == 0:
            tm = t
    return tm


# ----------------------------- wrapper --------------------------------------

def basic_conv2d(x_nchw, w_oihw, gamma, beta, running_mean, running_var,
                 *, stride=1, padding=0, dilation=1, eps=1e-5):
    N, C, H, W = x_nchw.shape
    OC, _, KH, KW = w_oihw.shape
    OH = (H + 2 * padding - dilation * (KH - 1) - 1) // stride + 1
    OW = (W + 2 * padding - dilation * (KW - 1) - 1) // stride + 1
    M = OH * OW
    K = C * KH * KW
    KP = _round_up(K, 16)                     # bf16 sublane alignment (zero padded)

    # --- wrapper glue (cheap at channel-small shapes; fused by XLA) ---------
    # Transposed im2col: rows = k (c-major, then kh, kw), cols = output pixels.
    x_pad = jnp.pad(x_nchw, ((0, 0), (0, 0),
                             (padding, padding), (padding, padding)))
    taps = []
    for kh in range(KH):                      # static, small
        for kw in range(KW):
            h0, w0 = kh * dilation, kw * dilation
            taps.append(x_pad[:, :,
                              h0:h0 + (OH - 1) * stride + 1:stride,
                              w0:w0 + (OW - 1) * stride + 1:stride])  # (N,C,OH,OW)
    patch = jnp.stack(taps, axis=2)                    # (N, C, KH*KW, OH, OW)
    patch = patch.reshape(N, K, M)                     # k = c*KH*KW + kh*KW + kw
    patch = jnp.pad(patch, ((0, 0), (0, KP - K), (0, 0))).astype(jnp.bfloat16)

    # Fold eval-mode BN: scale into weights, single bias left for the kernel.
    inv_std = gamma / jnp.sqrt(running_var + eps)                       # (OC,)
    w_flat = w_oihw.reshape(OC, K) * inv_std[:, None]                   # (OC, K)
    w_flat = jnp.pad(w_flat, ((0, 0), (0, KP - K))).astype(jnp.bfloat16)
    bias = (beta - running_mean * inv_std).reshape(OC, 1).astype(jnp.float32)

    # --- spatial tiling (lane-dense 128-multiple tiles of OH*OW) ------------
    TM = _pick_spatial_tile(M)
    n_m_tiles = M // TM

    # --- VMEM budget: true padded footprints, double-buffered, per-gen cap --
    patch_blk = _vmem_block_bytes((KP, TM), jnp.bfloat16)
    out_blk = _vmem_block_bytes((OC, TM), jnp.float32)
    w_blk = _vmem_block_bytes((OC, KP), jnp.bfloat16)
    bias_blk = _vmem_block_bytes((OC, 1), jnp.float32)
    vmem_need = 2 * (patch_blk + out_blk) + 2 * (w_blk + bias_blk)
    vmem_cap = 64 * 1024 * 1024               # conservative (v7x) fallback
    try:
        vmem_cap = int(getattr(pltpu.get_tpu_info(), "vmem_capacity_bytes",
                               vmem_cap))
    except Exception:
        pass
    vmem_limit = int(min(max(2 * vmem_need, 16 * 1024 * 1024),
                         (vmem_cap * 3) // 4))

    out = pl.pallas_call(
        _matmul_bias_kernel,
        grid=(N, n_m_tiles),
        in_specs=[
            pl.BlockSpec((None, KP, TM), lambda n, j: (n, 0, j)),   # patch tile
            pl.BlockSpec((OC, KP), lambda n, j: (0, 0)),            # weights (resident)
            pl.BlockSpec((OC, 1), lambda n, j: (0, 0)),             # bias (resident)
        ],
        out_specs=pl.BlockSpec((None, OC, TM), lambda n, j: (n, 0, j)),
        out_shape=jax.ShapeDtypeStruct((N, OC, M), jnp.float32),
        compiler_params=pltpu.CompilerParams(
            dimension_semantics=("parallel", "parallel"),
            vmem_limit_bytes=vmem_limit),
    )(patch, w_flat, bias)

    # Already in NCHW element order: pure (free) reshape, no transpose.
    return out.reshape(N, OC, OH, OW)


# ----------------------------- references -----------------------------------

def _reference_f32(x, w, gamma, beta, mean, var, *, stride, padding, dilation,
                   eps=1e-5):
    conv = lax.conv_general_dilated(
        x, w, window_strides=(stride, stride),
        padding=[(padding, padding), (padding, padding)],
        rhs_dilation=(dilation, dilation),
        dimension_numbers=('NCHW', 'OIHW', 'NCHW'),
        precision=lax.Precision.HIGHEST)
    inv_std = gamma / jnp.sqrt(var + eps)
    s = inv_std.reshape(1, -1, 1, 1)
    b = (beta - mean * inv_std).reshape(1, -1, 1, 1)
    return conv * s + b


def _reference_bf16(x, w, gamma, beta, mean, var, *, stride, padding, dilation,
                    eps=1e-5):
    # Same bf16 operand rounding as the kernel (scale folded into weights),
    # f32 accumulation -> tight comparison target.
    inv_std = gamma / jnp.sqrt(var + eps)
    wq = (w * inv_std.reshape(-1, 1, 1, 1)).astype(jnp.bfloat16).astype(jnp.float32)
    xq = x.astype(jnp.bfloat16).astype(jnp.float32)
    conv = lax.conv_general_dilated(
        xq, wq, window_strides=(stride, stride),
        padding=[(padding, padding), (padding, padding)],
        rhs_dilation=(dilation, dilation),
        dimension_numbers=('NCHW', 'OIHW', 'NCHW'),
        precision=lax.Precision.HIGHEST)
    b = (beta - mean * inv_std).reshape(1, -1, 1, 1)
    return conv + b


# ----------------------------- main ------------------------------------------

if __name__ == "__main__":
    # BasicConv2d(in_planes=4, out_planes=8, kernel_size=3, stride=1, padding=1)
    N, C, H, W = 2, 4, 16, 16
    OC, KH, KW = 8, 3, 3
    stride, padding, dilation = 1, 1, 1

    key = jax.random.PRNGKey(0)
    kx, kw, kg, kb, km, kv = jax.random.split(key, 6)
    x = jax.random.normal(kx, (N, C, H, W), jnp.float32)
    w = jax.random.normal(kw, (OC, C, KH, KW), jnp.float32) * 0.1

    # Non-trivial eval-mode BatchNorm2d parameters / running statistics.
    gamma = jax.random.uniform(kg, (OC,), jnp.float32, 0.5, 1.5)
    beta = jax.random.normal(kb, (OC,), jnp.float32) * 0.1
    running_mean = jax.random.normal(km, (OC,), jnp.float32) * 0.1
    running_var = jax.random.uniform(kv, (OC,), jnp.float32, 0.5, 1.5)

    fn = jax.jit(functools.partial(basic_conv2d, stride=stride,
                                   padding=padding, dilation=dilation))
    out = jax.block_until_ready(fn(x, w, gamma, beta, running_mean, running_var))

    ref_bf16 = _reference_bf16(x, w, gamma, beta, running_mean, running_var,
                               stride=stride, padding=padding, dilation=dilation)
    ref_f32 = _reference_f32(x, w, gamma, beta, running_mean, running_var,
                             stride=stride, padding=padding, dilation=dilation)

    assert out.shape == ref_f32.shape == (N, OC, H, W)
    # Tight check vs a reference with the same bf16 operand rounding.
    assert jnp.allclose(out, ref_bf16, atol=2e-3, rtol=2e-3)
    # Loose sanity check vs the full-f32 reference (bf16 operand quantization).
    assert jnp.allclose(out, ref_f32, atol=5e-2, rtol=5e-2)

    print("KERNEL_OK")
</pallas_src>

<mosaic_0001>
module attributes {stable_mosaic.version = 11 : i64} {
  func.func @_matmul_bias_kernel(%arg0: i32, %arg1: i32, %arg2: memref<1x48x256xbf16, #tpu.memory_space<vmem>>, %arg3: memref<8x48xbf16, #tpu.memory_space<vmem>>, %arg4: memref<8x1xf32, #tpu.memory_space<vmem>>, %arg5: memref<1x8x256xf32, #tpu.memory_space<vmem>>) attributes {dimension_semantics = [#tpu.dimension_semantics<parallel>, #tpu.dimension_semantics<parallel>], iteration_bounds = array<i64: 2, 1>, scalar_prefetch = 0 : i64, scratch_operands = 0 : i64, tpu.core_type = #tpu.core_type<tc>, window_params = [{transform_indices = @transform_0, window_bounds = array<i64: 1, 48, 256>}, {pipeline_mode = #tpu.pipeline_mode<synchronous>, transform_indices = @transform_1, window_bounds = array<i64: 8, 48>}, {pipeline_mode = #tpu.pipeline_mode<synchronous>, transform_indices = @transform_2, window_bounds = array<i64: 8, 1>}, {transform_indices = @transform_3, window_bounds = array<i64: 1, 8, 256>}]} {
    %c0 = arith.constant 0 : index
    %c0_0 = arith.constant 0 : index
    %0 = vector.load %arg3[%c0, %c0_0] : memref<8x48xbf16, #tpu.memory_space<vmem>>, vector<8x48xbf16>
    %c0_1 = arith.constant 0 : index
    %c0_2 = arith.constant 0 : index
    %c0_3 = arith.constant 0 : index
    %1 = vector.load %arg2[%c0_1, %c0_2, %c0_3] : memref<1x48x256xbf16, #tpu.memory_space<vmem>>, vector<1x48x256xbf16>
    %2 = vector.shape_cast %1 : vector<1x48x256xbf16> to vector<48x256xbf16>
    %cst = arith.constant dense<0.000000e+00> : vector<8x256xf32>
    %3 = tpu.matmul %0, %2, %cst {dimension_numbers = #tpu.dot_dimension_numbers<[1], [0], [0], [1], [0, 0, 1, 1], [], []>} : vector<8x48xbf16>, vector<48x256xbf16>, vector<8x256xf32> -> vector<8x256xf32>
    %c0_4 = arith.constant 0 : index
    %c0_5 = arith.constant 0 : index
    %4 = vector.load %arg4[%c0_4, %c0_5] : memref<8x1xf32, #tpu.memory_space<vmem>>, vector<8x1xf32>
    %5 = vector.broadcast %4 : vector<8x1xf32> to vector<8x256xf32>
    %6 = arith.addf %3, %5 : vector<8x256xf32>
    %c0_6 = arith.constant 0 : index
    %c0_7 = arith.constant 0 : index
    %c0_8 = arith.constant 0 : index
    %7 = vector.load %arg5[%c0_6, %c0_7, %c0_8] : memref<1x8x256xf32, #tpu.memory_space<vmem>>, vector<1x8x256xf32>
    %8 = vector.shape_cast %7 : vector<1x8x256xf32> to vector<8x256xf32>
    %9 = vector.shape_cast %6 : vector<8x256xf32> to vector<1x8x256xf32>
    tpu.vector_store %arg5[%c0_6, %c0_7, %c0_8], %9 {strides = array<i32>} : memref<1x8x256xf32, #tpu.memory_space<vmem>>, vector<1x8x256xf32>,
    return
  }
  func.func @transform_0(%arg0: i32, %arg1: i32) -> (i32, i32, i32) {
    %c0_i32 = arith.constant 0 : i32
    %c0_i32_0 = arith.constant 0 : i32
    return %arg0, %c0_i32, %arg1 : i32, i32, i32
  }
  func.func @transform_1(%arg0: i32, %arg1: i32) -> (i32, i32) {
    %c0_i32 = arith.constant 0 : i32
    %c0_i32_0 = arith.constant 0 : i32
    %c0_i32_1 = arith.constant 0 : i32
    return %c0_i32, %c0_i32_0 : i32, i32
  }
  func.func @transform_2(%arg0: i32, %arg1: i32) -> (i32, i32) {
    %c0_i32 = arith.constant 0 : i32
    %c0_i32_0 = arith.constant 0 : i32
    %c0_i32_1 = arith.constant 0 : i32
    return %c0_i32, %c0_i32_0 : i32, i32
  }
  func.func @transform_3(%arg0: i32, %arg1: i32) -> (i32, i32, i32) {
    %c0_i32 = arith.constant 0 : i32
    %c0_i32_0 = arith.constant 0 : i32
    return %arg0, %c0_i32, %arg1 : i32, i32, i32
  }
}

</mosaic_0001>

<llo_original>
// kernel: basic_conv2d.1
$region0: #{basic_conv2d.1}
  #allocation0 [shape = 'u32[]', space=smem, size = 0x4, offset = 0x4, fixed_abs, tag = 'smem constant byte address 0x4 - core index']
  #allocation1 [shape = 'u32[144,128]{1,0:T(1,128)}', space=vmem, size = 0x12000, scoped, tag = 'internal scratch']
  %s0 = inlined_call_operand.vmem [shape: bf16[2,48,256], index: 0, kind: input, shape index: {}]
  %s1 = inlined_call_operand.vmem [shape: bf16[8,48], index: 1, kind: input, shape index: {}]
  %s2 = inlined_call_operand.vmem [shape: f32[8,1], index: 2, kind: input, shape index: {}]
  %s3 = inlined_call_operand.vmem [shape: f32[2,8,256], index: 3, kind: output, shape index: {}]
  %s4 = sld [smem:[#allocation0]]
  $region45: #{basic_conv2d.1} parent=0
    _
  %s6 = ssub.s32 1, %s4
  %s7 = scalar_select 0, %s6, %s4
  loop: start=0, step=1, limit=4
  $region2: #{basic_conv2d.1} parent=0 // loop_pre_header
    _
  $region3: #{basic_conv2d.1} parent=0 // loop_header
    %s9 = sphi 0, %s13
    %p10 = scmp.ge.s32.totalorder %s9, 4
    %s16 = sphi 0, %s28
    %s17 = sphi 0, %s24
    %s18 = sphi 0, %s16
    %s19 = sphi 0, %s17
    %s20 = sphi 0, %s18
    %s21 = sphi 0, %s19
    %s33 = sphi 0, %s35
    %s36 = sphi 0, %s33
    %s37 = sphi 0, %s36
    %s53 = sphi 0, %s37
    %s57 = sphi 0, %s57
    %s59 = sphi 0, %s57
    %s60 = sphi 0, %s59
    %s74 = sphi 0, %s60
    %s78 = sphi 0, %s78
    %s80 = sphi 0, %s78
    %s81 = sphi 0, %s80
    %s95 = sphi 0, %s81
    %s103 = sphi 0, %s105
    %s106 = sphi 0, %s103
    %s107 = sphi 0, %s106
    %s123 = sphi 0, %s107
  $region4: #{basic_conv2d.1} parent=0 // loop_header_branch
    %12 = sbr.rel (%p10) target = $region8
  $region5: #{basic_conv2d.1} parent=0 // loop_body
    %s14 = ssub.s32 %s9, 1
    %s15 = ssub.s32 %s9, 2
    %s22 = sadd.s32 1, %s17
    %p23 = scmp.ge.s32.totalorder %s22, 1
    %s24 = scalar_select %p23, 0, %s22
    %s25 = sadd.s32 1, %s16
    %s26 = scalar_select %p23, %s25, %s16
    %p27 = scmp.ge.s32.totalorder %s26, 2
    %s28 = scalar_select %p27, 0, %s26
    %s29 = ssub.s32 %s16, %s28
    %s30 = ssub.s32 %s17, %s24
    %s31 = sor.u32 %s29, %s30
    %p32 = scmp.eq.s32.totalorder %s31, 0
    %s34 = sadd.s32 %s33, 1
    %s35 = scalar_select %p32, %s33, %s34
    %p38 = pneg %p32
    %p39 = scmp.eq.s32.totalorder %s9, 1
    %p40 = por %p38, %p39
    %p41 = scmp.ne.s32.totalorder %s33, %s36
    %p42 = scmp.eq.s32.totalorder %s9, 0
    %p43 = por %p41, %p42
    %p44 = scmp.ne.s32.totalorder %s33, %s36
    %p45 = scmp.eq.s32.totalorder %s14, 1
    %p46 = por %p44, %p45
    %p47 = scmp.ne.s32.totalorder %s36, %s37
    %p48 = scmp.eq.s32.totalorder %s14, 0
    %p49 = por %p47, %p48
    %p50 = scmp.ne.s32.totalorder %s36, %s37
    %p51 = scmp.eq.s32.totalorder %s15, 1
    %p52 = por %p50, %p51
    %p54 = scmp.ne.s32.totalorder %s37, %s53
    %p55 = scmp.eq.s32.totalorder %s15, 0
    %p56 = por %p54, %p55
    %s58 = sadd.s32 %s57, 1
    %p61 = scmp.eq.s32.totalorder %s9, 1
    %p62 = scmp.ne.s32.totalorder %s57, %s59
    %p63 = scmp.eq.s32.totalorder %s9, 0
    %p64 = por %p62, %p63
    %p65 = scmp.ne.s32.totalorder %s57, %s59
    %p66 = scmp.eq.s32.totalorder %s14, 1
    %p67 = por %p65, %p66
    %p68 = scmp.ne.s32.totalorder %s59, %s60
    %p69 = scmp.eq.s32.totalorder %s14, 0
    %p70 = por %p68, %p69
    %p71 = scmp.ne.s32.totalorder %s59, %s60
    %p72 = scmp.eq.s32.totalorder %s15, 1
    %p73 = por %p71, %p72
    %p75 = scmp.ne.s32.totalorder %s60, %s74
    %p76 = scmp.eq.s32.totalorder %s15, 0
    %p77 = por %p75, %p76
    %s79 = sadd.s32 %s78, 1
    %p82 = scmp.eq.s32.totalorder %s9, 1
    %p83 = scmp.ne.s32.totalorder %s78, %s80
    %p84 = scmp.eq.s32.totalorder %s9, 0
    %p85 = por %p83, %p84
    %p86 = scmp.ne.s32.totalorder %s78, %s80
    %p87 = scmp.eq.s32.totalorder %s14, 1
    %p88 = por %p86, %p87
    %p89 = scmp.ne.s32.totalorder %s80, %s81
    %p90 = scmp.eq.s32.totalorder %s14, 0
    %p91 = por %p89, %p90
    %p92 = scmp.ne.s32.totalorder %s80, %s81
    %p93 = scmp.eq.s32.totalorder %s15, 1
    %p94 = por %p92, %p93
    %p96 = scmp.ne.s32.totalorder %s81, %s95
    %p97 = scmp.eq.s32.totalorder %s15, 0
    %p98 = por %p96, %p97
    %s99 = ssub.s32 %s16, %s28
    %s100 = ssub.s32 %s17, %s24
    %s101 = sor.u32 %s99, %s100
    %p102 = scmp.eq.s32.totalorder %s101, 0
    %s104 = sadd.s32 %s103, 1
    %s105 = scalar_select %p102, %s103, %s104
    %p108 = pneg %p102
    %p109 = scmp.eq.s32.totalorder %s9, 1
    %p110 = por %p108, %p109
    %p111 = scmp.ne.s32.totalorder %s103, %s106
    %p112 = scmp.eq.s32.totalorder %s9, 0
    %p113 = por %p111, %p112
    %p114 = scmp.ne.s32.totalorder %s103, %s106
    %p115 = scmp.eq.s32.totalorder %s14, 1
    %p116 = por %p114, %p115
    %p117 = scmp.ne.s32.totalorder %s106, %s107
    %p118 = scmp.eq.s32.totalorder %s14, 0
    %p119 = por %p117, %p118
    %p120 = scmp.ne.s32.totalorder %s106, %s107
    %p121 = scmp.eq.s32.totalorder %s15, 1
    %p122 = por %p120, %p121
    %p124 = scmp.ne.s32.totalorder %s107, %s123
    %p125 = scmp.eq.s32.totalorder %s15, 0
    %p126 = por %p124, %p125
    %p127 = scmp.le.s32.totalorder 1, %s9
    %p128 = scmp.lt.s32.totalorder %s9, 3
    %p129 = pnand %p127, %p128
    %p130 = pneg %p129
    // Predicated region
    $region9: #{basic_conv2d.1} parent=5 // pred_check
      _
    $region10: #{basic_conv2d.1} parent=5 // pred_check_branch
      %132 = sbr.rel (%p129) target = $region12
    $region11: #{basic_conv2d.1} parent=5 // pred_region
      %s133 = ssub.s32 %s9, 1
      // Predicated region
      $region13: #{basic_conv2d.1} parent=11 // pred_check
        %p134 = pneg %p70
      $region14: #{basic_conv2d.1} parent=11 // pred_check_branch
        %136 = sbr.rel (%p134) target = $region16
      $region15: #{basic_conv2d.1} parent=11 // pred_region
        _
      $region16: #{basic_conv2d.1} parent=11 // pred_fallthru
        _
      // Predicated region
      $region17: #{basic_conv2d.1} parent=11 // pred_check
        %p137 = pneg %p91
      $region18: #{basic_conv2d.1} parent=11 // pred_check_branch
        %139 = sbr.rel (%p137) target = $region20
      $region19: #{basic_conv2d.1} parent=11 // pred_region
        _
      $region20: #{basic_conv2d.1} parent=11 // pred_fallthru
        _
    $region12: #{basic_conv2d.1} parent=5 // pred_fallthru
      _
    %p140 = scmp.lt.s32.totalorder %s9, 2
    // Predicated region
    $region21: #{basic_conv2d.1} parent=5 // pred_check
      %p141 = pneg %p140
    $region22: #{basic_conv2d.1} parent=5 // pred_check_branch
      %143 = sbr.rel (%p141) target = $region24
    $region23: #{basic_conv2d.1} parent=5 // pred_region
      // Predicated region
      $region25: #{basic_conv2d.1} parent=23 // pred_check
        %p144 = pneg %p43
      $region26: #{basic_conv2d.1} parent=23 // pred_check_branch
        %146 = sbr.rel (%p144) target = $region28
      $region27: #{basic_conv2d.1} parent=23 // pred_region
        %s147 = smul.u32 2, %s17
        %p148 = scmp.lt.s32.totalorder %s16, 1
        %s149 = scalar_select %p148, %s16, 1
        %p150 = scmp.lt.s32.totalorder %s147, 1
        %s151 = scalar_select %p150, %s147, 1
        %s152 = smul.addr %s149, 12
        %s153 = sadd.s32 %s151, %s152
        %s154 = smul.addr %s153, 4
        %s155 = scalar_lea.vmem %s0, %s154
        %s156 = smul.u32 2, %s17
      $region28: #{basic_conv2d.1} parent=23 // pred_fallthru
        _
    $region24: #{basic_conv2d.1} parent=5 // pred_fallthru
      _
    %p157 = scmp.le.s32.totalorder 1, %s9
    %p158 = scmp.lt.s32.totalorder %s9, 3
    %p159 = pnand %p157, %p158
    %p160 = pneg %p159
    // Predicated region
    $region29: #{basic_conv2d.1} parent=5 // pred_check
      _
    $region30: #{basic_conv2d.1} parent=5 // pred_check_branch
      %162 = sbr.rel (%p159) target = $region32
    $region31: #{basic_conv2d.1} parent=5 // pred_region
      %s163 = ssub.s32 %s9, 1
      %s164 = smul.u32 2, %s19
      %p165 = scmp.lt.s32.totalorder %s18, 1
      %s166 = scalar_select %p165, %s18, 1
      %p167 = scmp.lt.s32.totalorder %s164, 1
      %s168 = scalar_select %p167, %s164, 1
      %s169 = smul.addr %s166, 12
      %s170 = sadd.s32 %s168, %s169
      %s171 = smul.addr %s170, 4
      %s172 = scalar_lea.vmem %s0, %s171
      %p173 = pneg %p49
      %p174 = pneg %p46
      %p175 = pneg %p70
      %p176 = pneg %p67
      %p177 = pneg %p91
      %p178 = pneg %p88
      %p179 = pneg %p119
      %p180 = pneg %p116
      %s181 = smul.u32 2, %s19
      %p182 = scmp.lt.s32.totalorder %s18, 1
      %s183 = scalar_select %p182, %s18, 1
      %p184 = scmp.lt.s32.totalorder %s181, 1
      %s185 = scalar_select %p184, %s181, 1
      %s186 = smul.addr %s183, 2
      %s187 = sadd.s32 %s185, %s186
      %s188 = smul.addr %s187, 8
      %s189 = scalar_lea.vmem %s3, %s188
      %s190 = smul.u32 2, %s19
      %p191 = scmp.lt.s32.totalorder %s18, 1
      %s192 = scalar_select %p191, %s18, 1
      %p193 = scmp.lt.s32.totalorder %s190, 1
      %s194 = scalar_select %p193, %s190, 1
      %s195 = smul.addr %s192, 12
      %s196 = sadd.s32 %s194, %s195
      %s197 = smul.addr %s196, 4
      %s198 = scalar_lea.vmem %s0, %s197
      %s199 = smul.u32 2, %s19
      %s200 = smul.u32 2, %s19
      %p201 = scmp.lt.s32.totalorder %s18, 1
      %s202 = scalar_select %p201, %s18, 1
      %p203 = scmp.lt.s32.totalorder %s200, 1
      %s204 = scalar_select %p203, %s200, 1
      %s205 = smul.addr %s202, 2
      %s206 = sadd.s32 %s204, %s205
      %s207 = smul.addr %s206, 8
      %s208 = scalar_lea.vmem %s3, %s207
      %s209 = smul.u32 2, %s19
      %v211 = vld [vmem:[%s1] sm:$0xf]
      %v212 = vld [vmem:[%s198] sm:$0xff]
      %v213 = vld [vmem:[%s198 + $0x8] sm:$0xff]
      %v214 = vld [vmem:[%s198 + $0x10] sm:$0xff]
      %v215 = vld [vmem:[%s198 + $0x18] sm:$0xff]
      %v216 = vld [vmem:[%s198 + $0x20] sm:$0xff]
      %v217 = vld [vmem:[%s198 + $0x28] sm:$0xff]
      %v218 = vld [vmem:[%s2] sm:$0xff]
      %220 = vset.pattern.permute.xlu0 0
      %221 = vperm.xlu0 %220, %v218
      %v222 = vpop.permute.xlu0 %221
      %v230 = vunpack.c.l.b16 %v212
      %v231 = vunpack.c.h.b16 %v212
      %v232 = vunpack.c.l.b16 %v213
      %v233 = vunpack.c.h.b16 %v213
      %v234 = vunpack.c.l.b16 %v214
      %v235 = vunpack.c.h.b16 %v214
      %v236 = vunpack.c.l.b16 %v215
      %v237 = vunpack.c.h.b16 %v215
      %v238 = vunpack.c.l.b16 %v216
      %v239 = vunpack.c.h.b16 %v216
      %v240 = vunpack.c.l.b16 %v217
      %v241 = vunpack.c.h.b16 %v217
      %v242 = vpack.c.b16 %v232, %v230
      %v243 = vpack.c.b16 %v233, %v231
      %v244 = vpack.c.b16 %v236, %v234
      %v245 = vpack.c.b16 %v237, %v235
      %v246 = vpack.c.b16 %v240, %v238
      %v247 = vpack.c.b16 %v241, %v239
      %vm254 = vcmask 392192
      %v256 = vsel %vm254, %v211, 0
      %258 = vmatprep.subr.bf16.mxu0 %v243
      %259 = vmatpush1.bf16.msra.mxu0 %v242
      %260 = vmatprep.subr.bf16.mxu0 %v245
      %261 = vmatpush1.bf16.msra.mxu0 %v244
      %262 = vmatprep.subr.bf16.mxu0 %v247
      %263 = vmatpush1.bf16.msra.mxu0 %v246
      %264 = vmatprep.subr.bf16.mxu0 0
      %265 = vmatpush1.bf16.msra.mxu0 0
      %266 = vmatprep.subr.bf16.mxu0 0
      %267 = vmatpush1.bf16.msra.mxu0 0
      %268 = vmatprep.subr.bf16.mxu0 0
      %269 = vmatpush1.bf16.msra.mxu0 0
      %270 = vmatprep.subr.bf16.mxu0 0
      %271 = vmatpush1.bf16.msra.mxu0 0
      %272 = vmatprep.subr.bf16.mxu0 0
      %273 = vmatpush1.bf16.msra.mxu0 0
      %274 = vmatprep.subr.bf16.mxu0 0
      %275 = vmatpush1.bf16.msra.mxu0 0
      %276 = vmatprep.subr.bf16.mxu0 0
      %277 = vmatpush1.bf16.msra.mxu0 0
      %278 = vmatprep.subr.bf16.mxu0 0
      %279 = vmatpush1.bf16.msra.mxu0 0
      %280 = vmatprep.subr.bf16.mxu0 0
      %281 = vmatpush1.bf16.msra.mxu0 0
      %282 = vmatprep.subr.bf16.mxu0 0
      %283 = vmatpush1.bf16.msra.mxu0 0
      %284 = vmatprep.subr.bf16.mxu0 0
      %285 = vmatpush1.bf16.msra.mxu0 0
      %286 = vmatprep.subr.bf16.mxu0 0
      %287 = vmatpush1.bf16.msra.mxu0 0
      %288 = vmatprep.subr.bf16.mxu0 0
      %289 = vmatpush1.bf16.msra.mxu0 0
      %290 = vmatprep.mubr.bf16.mxu0 0
      %291 = vmatmul.mubr.bf16.gmra.mrb[0].mxu0 %v256
      %v292 = vpop.f32.mrb[0].mxu0
      %v293 = vadd.f32 %v222, %v292
      %v294 = vpop.f32.mrb[0].mxu0
      %v295 = vadd.f32 %v222, %v294
      %v296 = vpop.f32.mrb[0].mxu0
      %v297 = vpop.f32.mrb[0].mxu0
      %298 = vdwg.mxu0
      %299 = vst [vmem:[%s208] sm:$0xff] %v293
      %300 = vst [vmem:[%s208 + $0x8] sm:$0xff] %v295
      %s301 = smul.u32 2, %s19
      %p302 = scmp.lt.s32.totalorder %s18, 1
      %s303 = scalar_select %p302, %s18, 1
      %p304 = scmp.lt.s32.totalorder %s301, 1
      %s305 = scalar_select %p304, %s301, 1
      %s306 = smul.addr %s303, 2
      %s307 = sadd.s32 %s305, %s306
      %s308 = smul.addr %s307, 8
      %s309 = scalar_lea.vmem %s3, %s308
      // Predicated region
      $region33: #{basic_conv2d.1} parent=31 // pred_check
        %p310 = pneg %p116
      $region34: #{basic_conv2d.1} parent=31 // pred_check_branch
        %312 = sbr.rel (%p310) target = $region36
      $region35: #{basic_conv2d.1} parent=31 // pred_region
        %s313 = smul.u32 2, %s19
      $region36: #{basic_conv2d.1} parent=31 // pred_fallthru
        _
    $region32: #{basic_conv2d.1} parent=5 // pred_fallthru
      _
    %p314 = scmp.le.s32.totalorder 2, %s9
    // Predicated region
    $region37: #{basic_conv2d.1} parent=5 // pred_check
      %p315 = pneg %p314
    $region38: #{basic_conv2d.1} parent=5 // pred_check_branch
      %317 = sbr.rel (%p315) target = $region40
    $region39: #{basic_conv2d.1} parent=5 // pred_region
      %s318 = ssub.s32 %s9, 2
      // Predicated region
      $region41: #{basic_conv2d.1} parent=39 // pred_check
        %p319 = pneg %p122
      $region42: #{basic_conv2d.1} parent=39 // pred_check_branch
        %321 = sbr.rel (%p319) target = $region44
      $region43: #{basic_conv2d.1} parent=39 // pred_region
        %s322 = smul.u32 2, %s21
        %p323 = scmp.lt.s32.totalorder %s20, 1
        %s324 = scalar_select %p323, %s20, 1
        %p325 = scmp.lt.s32.totalorder %s322, 1
        %s326 = scalar_select %p325, %s322, 1
        %s327 = smul.addr %s324, 2
        %s328 = sadd.s32 %s326, %s327
        %s329 = smul.addr %s328, 8
        %s330 = scalar_lea.vmem %s3, %s329
      $region44: #{basic_conv2d.1} parent=39 // pred_fallthru
        _
    $region40: #{basic_conv2d.1} parent=5 // pred_fallthru
      _
  $region6: #{basic_conv2d.1} parent=0 // loop_footer
    %s13 = sadd.s32 1, %s9
  $region7: #{basic_conv2d.1} parent=0 // loop_footer_branch
    %8 = sbr.rel target = $region3
  $region8: #{basic_conv2d.1} parent=0 // loop_exit
    _

</llo_original>
